<compile_context>
chip_gen: v6e
topology: v6e:2x2x1
jax: 0.10.0
libtpu: 0.0.40
codegen_flags: <defaults>
</compile_context>

<pallas_src>
import functools

import jax
import jax.numpy as jnp
from jax.experimental import pallas as pl
from jax.experimental.pallas import tpu as pltpu

_LANE = 128
_SUBLANE = 8
_NEG_SLOPE = 0.01      # nn.LeakyReLU default negative_slope
_TILE_B_CAP = 512      # multiple of 256: fills the v6e/v7x MXU granule


def _round_up(n, m):
    return ((n + m - 1) // m) * m


def _act_dtype_for_backend():
    """bf16 activations where the VPU has native bf16 (v6e/v7x); f32 otherwise."""
    try:
        kind = jax.devices()[0].device_kind.lower()
    except Exception:
        return jnp.float32
    if any(v in kind for v in ("v2", "v3", "v4", "v5")):
        return jnp.float32
    return jnp.bfloat16


def _mlp_kernel(x_ref, w1_ref, b1_ref, w2_ref, b2_ref, w3_ref, b3_ref,
                w4_ref, b4_ref, o_ref, *, act_dtype):
    mxu_dtype = w1_ref.dtype

    # In-kernel f32 -> bf16 cast of the x tile (VPU work hidden under the MXU);
    # avoids an extra full HBM pass over x in the wrapper.
    x = x_ref[...].astype(mxu_dtype)

    # Layer 1: Linear + LeakyReLU (bf16 MXU operands, f32 accumulate).
    h = jnp.dot(x, w1_ref[...], preferred_element_type=jnp.float32)
    h = (h + b1_ref[...]).astype(act_dtype)
    h = jnp.where(h > 0, h, _NEG_SLOPE * h)

    # Layer 2: Linear + LeakyReLU.
    h = jnp.dot(h.astype(mxu_dtype), w2_ref[...],
                preferred_element_type=jnp.float32)
    h = (h + b2_ref[...]).astype(act_dtype)
    h = jnp.where(h > 0, h, _NEG_SLOPE * h)

    # Dropout(p=0.1) is the identity in eval / inference mode.
    # TODO(synk): training-mode dropout would need pltpu.prng_seed +
    # pltpu.stateful_bernoulli with inverted (1/(1-p)) scaling.

    # Layer 3: Linear + ReLU.
    h = jnp.dot(h.astype(mxu_dtype), w3_ref[...],
                preferred_element_type=jnp.float32)
    h = (h + b3_ref[...]).astype(act_dtype)
    h = jnp.maximum(h, 0.0)

    # Layer 4 (out_features == 1): contract last dims of (1, D3) x (tile_b, D3)
    # to emit a lane-dense (1, tile_b) row directly (no transpose, no 128-wide
    # broadcast).  Kept in f32: this path never feeds the bf16 MXU again.
    y = jax.lax.dot_general(
        w4_ref[...], h.astype(jnp.float32),
        dimension_numbers=(((1,), (1,)), ((), ())),
        preferred_element_type=jnp.float32)            # (1, tile_b)
    y = y + b4_ref[0, 0]                               # scalar bias from SMEM
    o_ref[...] = y.astype(o_ref.dtype)


def init_params(key, in_dim):
    """PyTorch nn.Linear-style init (U(-1/sqrt(fan_in), 1/sqrt(fan_in))).
    Weights stored transposed relative to nn.Linear, i.e. (in, out)."""
    dims = [(in_dim, 2 * in_dim),
            (2 * in_dim, in_dim),
            (in_dim, max(in_dim // 2, 1)),
            (max(in_dim // 2, 1), 1)]
    params = {}
    for i, (fan_in, fan_out) in enumerate(dims, start=1):
        key, kw, kb = jax.random.split(key, 3)
        bound = 1.0 / float(fan_in) ** 0.5
        params[f"w{i}"] = jax.random.uniform(
            kw, (fan_in, fan_out), jnp.float32, -bound, bound)
        params[f"b{i}"] = jax.random.uniform(
            kb, (1, fan_out), jnp.float32, -bound, bound)
    return params


def pack_params(params, in_dim, compute_dtype=jnp.bfloat16):
    """Zero-pad feature widths to multiples of 128 (lane); cast MXU matmul
    weights to `compute_dtype`; biases and layer-4 params stay f32."""
    d_in = _round_up(in_dim, _LANE)
    d_h1 = _round_up(2 * in_dim, _LANE)
    d_h2 = _round_up(in_dim, _LANE)
    d_h3 = _round_up(max(in_dim // 2, 1), _LANE)

    def pad2(a, rows, cols):
        return jnp.pad(a, ((0, rows - a.shape[0]), (0, cols - a.shape[1])))

    return {
        "w1": pad2(params["w1"], d_in, d_h1).astype(compute_dtype),
        "b1": pad2(params["b1"], 1, d_h1).astype(jnp.float32),
        "w2": pad2(params["w2"], d_h1, d_h2).astype(compute_dtype),
        "b2": pad2(params["b2"], 1, d_h2).astype(jnp.float32),
        "w3": pad2(params["w3"], d_h2, d_h3).astype(compute_dtype),
        "b3": pad2(params["b3"], 1, d_h3).astype(jnp.float32),
        # Layer-4 weight as a padded row; runs in f32 (no bf16 rounding needed).
        "w4": pad2(params["w4"].T, 1, d_h3).astype(jnp.float32),
        "b4": params["b4"].astype(jnp.float32),            # (1, 1), goes to SMEM
    }


@functools.partial(jax.jit, static_argnames=("single_buffer_weights",))
def forward(x, packed, single_buffer_weights=True):
    """x: (B, in_dim) f32; packed: output of pack_params. Returns (B,) f32."""
    B, in_dim = x.shape
    d_in, d_h1 = packed["w1"].shape
    d_h2 = packed["w2"].shape[1]
    d_h3 = packed["w3"].shape[1]
    act_dtype = _act_dtype_for_backend()

    # Batch tiling: multiple of 8 sublanes, capped at 512 (multiple of 256).
    tile_b = min(_TILE_B_CAP, _round_up(B, _SUBLANE))
    b_pad = _round_up(B, tile_b)
    num_tiles = b_pad // tile_b
    # v7x megacore: even tile count so the "parallel" batch axis shards onto
    # both TensorCores (at most one extra all-zero tile; no-op when 1 tile).
    if num_tiles > 1 and num_tiles % 2 == 1:
        num_tiles += 1
        b_pad += tile_b

    # Pad batch (sublane) and features (lane); x stays f32 -- the bf16 cast
    # happens inside the kernel.
    xp = jnp.pad(x, ((0, b_pad - B), (0, d_in - in_dim)))

    resident = lambda i: (0, 0)   # constant index_map: DMA'd once, stays in VMEM

    def wspec(shape):
        if single_buffer_weights:
            return pl.BlockSpec(shape, resident, pipeline_mode=pl.Buffered(1))
        return pl.BlockSpec(shape, resident)

    in_specs = [
        pl.BlockSpec((tile_b, d_in), lambda i: (i, 0)),     # x tile (pipelined)
        wspec((d_in, d_h1)),                                # w1
        wspec((1, d_h1)),                                   # b1
        wspec((d_h1, d_h2)),                                # w2
        wspec((1, d_h2)),                                   # b2
        wspec((d_h2, d_h3)),                                # w3
        wspec((1, d_h3)),                                   # b3
        wspec((1, d_h3)),                                   # w4 (row, f32)
        pl.BlockSpec(memory_space=pltpu.MemorySpace.SMEM),  # b4 (1,1) scalar
    ]
    out_specs = pl.BlockSpec((1, tile_b), lambda i: (i, 0))

    # Explicit scoped-VMEM budget: single-buffered weights + double-buffered
    # x/out tiles + intermediates, ~30% headroom.
    nbytes = lambda a: int(a.size) * a.dtype.itemsize
    weight_bytes = sum(nbytes(packed[k]) for k in
                       ("w1", "b1", "w2", "b2", "w3", "b3", "w4"))
    x_tile_bytes = tile_b * d_in * 4
    out_tile_bytes = tile_b * 4
    interm_bytes = tile_b * max(d_h1, d_h2, d_h3) * 4 * 3
    needed = weight_bytes + 2 * (x_tile_bytes + out_tile_bytes) + interm_bytes
    vmem_limit = min(max(int(needed * 1.3), 32 << 20), 128 << 20)
    # TODO(synk): for in_dim >~ 2k on v7x (64 MiB/TC), stop keeping w1/w2 fully
    # resident; add a reduction grid axis and stream weight tiles instead.

    flops = 2 * b_pad * (d_in * d_h1 + d_h1 * d_h2 + d_h2 * d_h3 + d_h3)
    bytes_accessed = int(xp.size) * 4 + weight_bytes + b_pad * 4
    cost = pl.CostEstimate(flops=flops, transcendentals=0,
                           bytes_accessed=bytes_accessed)

    out = pl.pallas_call(
        functools.partial(_mlp_kernel, act_dtype=act_dtype),
        out_shape=jax.ShapeDtypeStruct((num_tiles, tile_b), jnp.float32),
        grid=(num_tiles,),
        in_specs=in_specs,
        out_specs=out_specs,
        compiler_params=pltpu.CompilerParams(
            dimension_semantics=("parallel",),
            vmem_limit_bytes=vmem_limit),
        cost_estimate=cost,
    )(xp,
      packed["w1"], packed["b1"],
      packed["w2"], packed["b2"],
      packed["w3"], packed["b3"],
      packed["w4"], packed["b4"])

    # Row-major (num_tiles, tile_b) == batch order: contiguous slice (no strided
    # column gather), drop batch padding.  (== .squeeze(-1) of the torch module)
    return out.reshape(-1)[:B]


def _reference_f32(x, params):
    """Pure-f32 pure-JAX reference (exact PyTorch eval-mode semantics)."""
    h = x @ params["w1"] + params["b1"]
    h = jnp.where(h > 0, h, _NEG_SLOPE * h)
    h = h @ params["w2"] + params["b2"]
    h = jnp.where(h > 0, h, _NEG_SLOPE * h)
    h = h @ params["w3"] + params["b3"]
    h = jnp.maximum(h, 0.0)
    h = h @ params["w4"] + params["b4"]
    return h[:, 0]


def _reference_matched(x, params, act_dtype=jnp.bfloat16,
                       mxu_dtype=jnp.bfloat16):
    """Same dtype plan as the kernel: bf16 MXU operands, f32 accumulation,
    activations in act_dtype, f32 final layer."""
    def mm(a, w):
        return jnp.dot(a.astype(mxu_dtype), w.astype(mxu_dtype),
                       preferred_element_type=jnp.float32)
    h = (mm(x, params["w1"]) + params["b1"]).astype(act_dtype)
    h = jnp.where(h > 0, h, _NEG_SLOPE * h)
    h = (mm(h, params["w2"]) + params["b2"]).astype(act_dtype)
    h = jnp.where(h > 0, h, _NEG_SLOPE * h)
    h = (mm(h, params["w3"]) + params["b3"]).astype(act_dtype)
    h = jnp.maximum(h, 0.0)
    y = h.astype(jnp.float32) @ params["w4"] + params["b4"]
    return y[:, 0]


if __name__ == "__main__":
    in_dim = 32
    batch = 8

    key = jax.random.PRNGKey(0)
    key, kx = jax.random.split(key)
    x = jax.random.normal(kx, (batch, in_dim), jnp.float32)
    params = init_params(key, in_dim)
    packed = pack_params(params, in_dim)

    try:
        y = forward(x, packed)
        jax.block_until_ready(y)
    except Exception:
        # Fallback for JAX versions that reject BlockSpec.pipeline_mode /
        # pl.Buffered(1): identical kernel with default (double) buffering.
        y = forward(x, packed, single_buffer_weights=False)
        jax.block_until_ready(y)

    assert y.shape == (batch,), y.shape

    act_dtype = _act_dtype_for_backend()
    y_matched = _reference_matched(x, params, act_dtype=act_dtype)
    assert jnp.allclose(y, y_matched, atol=2e-3, rtol=2e-3), (
        float(jnp.max(jnp.abs(y - y_matched))))
    # Loose sanity check vs full-f32 reference (bf16 operand/activation roundoff).
    y_f32 = _reference_f32(x, params)
    assert jnp.allclose(y, y_f32, atol=1e-1, rtol=1e-1), (
        float(jnp.max(jnp.abs(y - y_f32))))

    print("KERNEL_OK")
</pallas_src>

<mosaic_0001>
module attributes {stable_mosaic.version = 11 : i64} {
  func.func @_mlp_kernel(%arg0: i32, %arg1: memref<8x128xf32, #tpu.memory_space<vmem>>, %arg2: memref<128x128xbf16, #tpu.memory_space<vmem>>, %arg3: memref<1x128xf32, #tpu.memory_space<vmem>>, %arg4: memref<128x128xbf16, #tpu.memory_space<vmem>>, %arg5: memref<1x128xf32, #tpu.memory_space<vmem>>, %arg6: memref<128x128xbf16, #tpu.memory_space<vmem>>, %arg7: memref<1x128xf32, #tpu.memory_space<vmem>>, %arg8: memref<1x128xf32, #tpu.memory_space<vmem>>, %arg9: memref<1x1xf32, #tpu.memory_space<smem>>, %arg10: memref<1x8xf32, #tpu.memory_space<vmem>>) attributes {dimension_semantics = [#tpu.dimension_semantics<parallel>], iteration_bounds = array<i64: 1>, scalar_prefetch = 0 : i64, scratch_operands = 0 : i64, tpu.core_type = #tpu.core_type<tc>, window_params = [{transform_indices = @transform_0, window_bounds = array<i64: 8, 128>}, {pipeline_mode = #tpu.pipeline_mode<synchronous>, transform_indices = @transform_1, window_bounds = array<i64: 128, 128>}, {pipeline_mode = #tpu.pipeline_mode<synchronous>, transform_indices = @transform_2, window_bounds = array<i64: 1, 128>}, {pipeline_mode = #tpu.pipeline_mode<synchronous>, transform_indices = @transform_3, window_bounds = array<i64: 128, 128>}, {pipeline_mode = #tpu.pipeline_mode<synchronous>, transform_indices = @transform_4, window_bounds = array<i64: 1, 128>}, {pipeline_mode = #tpu.pipeline_mode<synchronous>, transform_indices = @transform_5, window_bounds = array<i64: 128, 128>}, {pipeline_mode = #tpu.pipeline_mode<synchronous>, transform_indices = @transform_6, window_bounds = array<i64: 1, 128>}, {pipeline_mode = #tpu.pipeline_mode<synchronous>, transform_indices = @transform_7, window_bounds = array<i64: 1, 128>}, {transform_indices = @transform_8, window_bounds = array<i64: 1, 1>}, {transform_indices = @transform_9, window_bounds = array<i64: 1, 8>}]} {
    %c0 = arith.constant 0 : index
    %c0_0 = arith.constant 0 : index
    %0 = vector.load %arg1[%c0, %c0_0] : memref<8x128xf32, #tpu.memory_space<vmem>>, vector<8x128xf32>
    %1 = arith.truncf %0 : vector<8x128xf32> to vector<8x128xbf16>
    %c0_1 = arith.constant 0 : index
    %c0_2 = arith.constant 0 : index
    %2 = vector.load %arg2[%c0_1, %c0_2] : memref<128x128xbf16, #tpu.memory_space<vmem>>, vector<128x128xbf16>
    %cst = arith.constant dense<0.000000e+00> : vector<8x128xf32>
    %3 = tpu.matmul %1, %2, %cst {dimension_numbers = #tpu.dot_dimension_numbers<[1], [0], [0], [1], [0, 0, 1, 1], [], []>} : vector<8x128xbf16>, vector<128x128xbf16>, vector<8x128xf32> -> vector<8x128xf32>
    %c0_3 = arith.constant 0 : index
    %c0_4 = arith.constant 0 : index
    %4 = vector.load %arg3[%c0_3, %c0_4] : memref<1x128xf32, #tpu.memory_space<vmem>>, vector<1x128xf32>
    %5 = vector.broadcast %4 : vector<1x128xf32> to vector<8x128xf32>
    %6 = arith.addf %3, %5 : vector<8x128xf32>
    %7 = arith.truncf %6 : vector<8x128xf32> to vector<8x128xbf16>
    %cst_5 = arith.constant 0.000000e+00 : bf16
    %8 = vector.broadcast %cst_5 : bf16 to vector<8x128xbf16>
    %9 = arith.cmpf ogt, %7, %8 : vector<8x128xbf16>
    %cst_6 = arith.constant 1.000980e-02 : bf16
    %10 = vector.broadcast %cst_6 : bf16 to vector<8x128xbf16>
    %11 = arith.mulf %10, %7 : vector<8x128xbf16>
    %12 = arith.select %9, %7, %11 : vector<8x128xi1>, vector<8x128xbf16>
    %c0_7 = arith.constant 0 : index
    %c0_8 = arith.constant 0 : index
    %13 = vector.load %arg4[%c0_7, %c0_8] : memref<128x128xbf16, #tpu.memory_space<vmem>>, vector<128x128xbf16>
    %cst_9 = arith.constant dense<0.000000e+00> : vector<8x128xf32>
    %14 = tpu.matmul %12, %13, %cst_9 {dimension_numbers = #tpu.dot_dimension_numbers<[1], [0], [0], [1], [0, 0, 1, 1], [], []>} : vector<8x128xbf16>, vector<128x128xbf16>, vector<8x128xf32> -> vector<8x128xf32>
    %c0_10 = arith.constant 0 : index
    %c0_11 = arith.constant 0 : index
    %15 = vector.load %arg5[%c0_10, %c0_11] : memref<1x128xf32, #tpu.memory_space<vmem>>, vector<1x128xf32>
    %16 = vector.broadcast %15 : vector<1x128xf32> to vector<8x128xf32>
    %17 = arith.addf %14, %16 : vector<8x128xf32>
    %18 = arith.truncf %17 : vector<8x128xf32> to vector<8x128xbf16>
    %cst_12 = arith.constant 0.000000e+00 : bf16
    %19 = vector.broadcast %cst_12 : bf16 to vector<8x128xbf16>
    %20 = arith.cmpf ogt, %18, %19 : vector<8x128xbf16>
    %cst_13 = arith.constant 1.000980e-02 : bf16
    %21 = vector.broadcast %cst_13 : bf16 to vector<8x128xbf16>
    %22 = arith.mulf %21, %18 : vector<8x128xbf16>
    %23 = arith.select %20, %18, %22 : vector<8x128xi1>, vector<8x128xbf16>
    %c0_14 = arith.constant 0 : index
    %c0_15 = arith.constant 0 : index
    %24 = vector.load %arg6[%c0_14, %c0_15] : memref<128x128xbf16, #tpu.memory_space<vmem>>, vector<128x128xbf16>
    %cst_16 = arith.constant dense<0.000000e+00> : vector<8x128xf32>
    %25 = tpu.matmul %23, %24, %cst_16 {dimension_numbers = #tpu.dot_dimension_numbers<[1], [0], [0], [1], [0, 0, 1, 1], [], []>} : vector<8x128xbf16>, vector<128x128xbf16>, vector<8x128xf32> -> vector<8x128xf32>
    %c0_17 = arith.constant 0 : index
    %c0_18 = arith.constant 0 : index
    %26 = vector.load %arg7[%c0_17, %c0_18] : memref<1x128xf32, #tpu.memory_space<vmem>>, vector<1x128xf32>
    %27 = vector.broadcast %26 : vector<1x128xf32> to vector<8x128xf32>
    %28 = arith.addf %25, %27 : vector<8x128xf32>
    %29 = arith.truncf %28 : vector<8x128xf32> to vector<8x128xbf16>
    %cst_19 = arith.constant 0.000000e+00 : bf16
    %30 = vector.broadcast %cst_19 : bf16 to vector<8x128xbf16>
    %31 = arith.maximumf %29, %30 : vector<8x128xbf16>
    %c0_20 = arith.constant 0 : index
    %c0_21 = arith.constant 0 : index
    %32 = vector.load %arg8[%c0_20, %c0_21] : memref<1x128xf32, #tpu.memory_space<vmem>>, vector<1x128xf32>
    %33 = arith.extf %31 : vector<8x128xbf16> to vector<8x128xf32>
    %cst_22 = arith.constant dense<0.000000e+00> : vector<1x8xf32>
    %34 = tpu.matmul %32, %33, %cst_22 {dimension_numbers = #tpu.dot_dimension_numbers<[1], [1], [0], [0], [0, 0, 1, 0], [], []>} : vector<1x128xf32>, vector<8x128xf32>, vector<1x8xf32> -> vector<1x8xf32>
    %c0_23 = arith.constant 0 : index
    %c0_24 = arith.constant 0 : index
    %35 = memref.load %arg9[%c0_23, %c0_24] : memref<1x1xf32, #tpu.memory_space<smem>>
    %36 = vector.broadcast %35 : f32 to vector<1x8xf32>
    %37 = arith.addf %34, %36 : vector<1x8xf32>
    %c0_25 = arith.constant 0 : index
    %c0_26 = arith.constant 0 : index
    %38 = vector.load %arg10[%c0_25, %c0_26] : memref<1x8xf32, #tpu.memory_space<vmem>>, vector<1x8xf32>
    tpu.vector_store %arg10[%c0_25, %c0_26], %37 {strides = array<i32>} : memref<1x8xf32, #tpu.memory_space<vmem>>, vector<1x8xf32>,
    return
  }
  func.func @transform_0(%arg0: i32) -> (i32, i32) {
    %c0_i32 = arith.constant 0 : i32
    %c0_i32_0 = arith.constant 0 : i32
    return %arg0, %c0_i32 : i32, i32
  }
  func.func @transform_1(%arg0: i32) -> (i32, i32) {
    %c0_i32 = arith.constant 0 : i32
    %c0_i32_0 = arith.constant 0 : i32
    %c0_i32_1 = arith.constant 0 : i32
    return %c0_i32, %c0_i32_0 : i32, i32
  }
  func.func @transform_2(%arg0: i32) -> (i32, i32) {
    %c0_i32 = arith.constant 0 : i32
    %c0_i32_0 = arith.constant 0 : i32
    %c0_i32_1 = arith.constant 0 : i32
    return %c0_i32, %c0_i32_0 : i32, i32
  }
  func.func @transform_3(%arg0: i32) -> (i32, i32) {
    %c0_i32 = arith.constant 0 : i32
    %c0_i32_0 = arith.constant 0 : i32
    %c0_i32_1 = arith.constant 0 : i32
    return %c0_i32, %c0_i32_0 : i32, i32
  }
  func.func @transform_4(%arg0: i32) -> (i32, i32) {
    %c0_i32 = arith.constant 0 : i32
    %c0_i32_0 = arith.constant 0 : i32
    %c0_i32_1 = arith.constant 0 : i32
    return %c0_i32, %c0_i32_0 : i32, i32
  }
  func.func @transform_5(%arg0: i32) -> (i32, i32) {
    %c0_i32 = arith.constant 0 : i32
    %c0_i32_0 = arith.constant 0 : i32
    %c0_i32_1 = arith.constant 0 : i32
    return %c0_i32, %c0_i32_0 : i32, i32
  }
  func.func @transform_6(%arg0: i32) -> (i32, i32) {
    %c0_i32 = arith.constant 0 : i32
    %c0_i32_0 = arith.constant 0 : i32
    %c0_i32_1 = arith.constant 0 : i32
    return %c0_i32, %c0_i32_0 : i32, i32
  }
  func.func @transform_7(%arg0: i32) -> (i32, i32) {
    %c0_i32 = arith.constant 0 : i32
    %c0_i32_0 = arith.constant 0 : i32
    %c0_i32_1 = arith.constant 0 : i32
    return %c0_i32, %c0_i32_0 : i32, i32
  }
  func.func @transform_8(%arg0: i32) -> (i32, i32) {
    %c0_i32 = arith.constant 0 : i32
    %c0_i32_0 = arith.constant 0 : i32
    %c0_i32_1 = arith.constant 0 : i32
    return %c0_i32, %c0_i32_0 : i32, i32
  }
  func.func @transform_9(%arg0: i32) -> (i32, i32) {
    %c0_i32 = arith.constant 0 : i32
    %c0_i32_0 = arith.constant 0 : i32
    return %arg0, %c0_i32 : i32, i32
  }
}

module attributes {stable_mosaic.version = 11 : i64} {
  func.func @_mlp_kernel(%arg0: i32, %arg1: memref<8x128xf32, #tpu.memory_space<vmem>>, %arg2: memref<128x128xbf16, #tpu.memory_space<vmem>>, %arg3: memref<1x128xf32, #tpu.memory_space<vmem>>, %arg4: memref<128x128xbf16, #tpu.memory_space<vmem>>, %arg5: memref<1x128xf32, #tpu.memory_space<vmem>>, %arg6: memref<128x128xbf16, #tpu.memory_space<vmem>>, %arg7: memref<1x128xf32, #tpu.memory_space<vmem>>, %arg8: memref<1x128xf32, #tpu.memory_space<vmem>>, %arg9: memref<1x1xf32, #tpu.memory_space<smem>>, %arg10: memref<1x8xf32, #tpu.memory_space<vmem>>) attributes {dimension_semantics = [#tpu.dimension_semantics<parallel>], iteration_bounds = array<i64: 1>, scalar_prefetch = 0 : i64, scratch_operands = 0 : i64, tpu.core_type = #tpu.core_type<tc>, window_params = [{transform_indices = @transform_0, window_bounds = array<i64: 8, 128>}, {pipeline_mode = #tpu.pipeline_mode<synchronous>, transform_indices = @transform_1, window_bounds = array<i64: 128, 128>}, {pipeline_mode = #tpu.pipeline_mode<synchronous>, transform_indices = @transform_2, window_bounds = array<i64: 1, 128>}, {pipeline_mode = #tpu.pipeline_mode<synchronous>, transform_indices = @transform_3, window_bounds = array<i64: 128, 128>}, {pipeline_mode = #tpu.pipeline_mode<synchronous>, transform_indices = @transform_4, window_bounds = array<i64: 1, 128>}, {pipeline_mode = #tpu.pipeline_mode<synchronous>, transform_indices = @transform_5, window_bounds = array<i64: 128, 128>}, {pipeline_mode = #tpu.pipeline_mode<synchronous>, transform_indices = @transform_6, window_bounds = array<i64: 1, 128>}, {pipeline_mode = #tpu.pipeline_mode<synchronous>, transform_indices = @transform_7, window_bounds = array<i64: 1, 128>}, {transform_indices = @transform_8, window_bounds = array<i64: 1, 1>}, {transform_indices = @transform_9, window_bounds = array<i64: 1, 8>}]} {
    %c0 = arith.constant 0 : index
    %c0_0 = arith.constant 0 : index
    %0 = vector.load %arg1[%c0, %c0_0] : memref<8x128xf32, #tpu.memory_space<vmem>>, vector<8x128xf32>
    %1 = arith.truncf %0 : vector<8x128xf32> to vector<8x128xbf16>
    %c0_1 = arith.constant 0 : index
    %c0_2 = arith.constant 0 : index
    %2 = vector.load %arg2[%c0_1, %c0_2] : memref<128x128xbf16, #tpu.memory_space<vmem>>, vector<128x128xbf16>
    %cst = arith.constant dense<0.000000e+00> : vector<8x128xf32>
    %3 = tpu.matmul %1, %2, %cst {dimension_numbers = #tpu.dot_dimension_numbers<[1], [0], [0], [1], [0, 0, 1, 1], [], []>} : vector<8x128xbf16>, vector<128x128xbf16>, vector<8x128xf32> -> vector<8x128xf32>
    %c0_3 = arith.constant 0 : index
    %c0_4 = arith.constant 0 : index
    %4 = vector.load %arg3[%c0_3, %c0_4] : memref<1x128xf32, #tpu.memory_space<vmem>>, vector<1x128xf32>
    %5 = vector.broadcast %4 : vector<1x128xf32> to vector<8x128xf32>
    %6 = arith.addf %3, %5 : vector<8x128xf32>
    %7 = arith.truncf %6 : vector<8x128xf32> to vector<8x128xbf16>
    %cst_5 = arith.constant 0.000000e+00 : bf16
    %8 = vector.broadcast %cst_5 : bf16 to vector<8x128xbf16>
    %9 = arith.cmpf ogt, %7, %8 : vector<8x128xbf16>
    %cst_6 = arith.constant 1.000980e-02 : bf16
    %10 = vector.broadcast %cst_6 : bf16 to vector<8x128xbf16>
    %11 = arith.mulf %10, %7 : vector<8x128xbf16>
    %12 = arith.select %9, %7, %11 : vector<8x128xi1>, vector<8x128xbf16>
    %c0_7 = arith.constant 0 : index
    %c0_8 = arith.constant 0 : index
    %13 = vector.load %arg4[%c0_7, %c0_8] : memref<128x128xbf16, #tpu.memory_space<vmem>>, vector<128x128xbf16>
    %cst_9 = arith.constant dense<0.000000e+00> : vector<8x128xf32>
    %14 = tpu.matmul %12, %13, %cst_9 {dimension_numbers = #tpu.dot_dimension_numbers<[1], [0], [0], [1], [0, 0, 1, 1], [], []>} : vector<8x128xbf16>, vector<128x128xbf16>, vector<8x128xf32> -> vector<8x128xf32>
    %c0_10 = arith.constant 0 : index
    %c0_11 = arith.constant 0 : index
    %15 = vector.load %arg5[%c0_10, %c0_11] : memref<1x128xf32, #tpu.memory_space<vmem>>, vector<1x128xf32>
    %16 = vector.broadcast %15 : vector<1x128xf32> to vector<8x128xf32>
    %17 = arith.addf %14, %16 : vector<8x128xf32>
    %18 = arith.truncf %17 : vector<8x128xf32> to vector<8x128xbf16>
    %cst_12 = arith.constant 0.000000e+00 : bf16
    %19 = vector.broadcast %cst_12 : bf16 to vector<8x128xbf16>
    %20 = arith.cmpf ogt, %18, %19 : vector<8x128xbf16>
    %cst_13 = arith.constant 1.000980e-02 : bf16
    %21 = vector.broadcast %cst_13 : bf16 to vector<8x128xbf16>
    %22 = arith.mulf %21, %18 : vector<8x128xbf16>
    %23 = arith.select %20, %18, %22 : vector<8x128xi1>, vector<8x128xbf16>
    %c0_14 = arith.constant 0 : index
    %c0_15 = arith.constant 0 : index
    %24 = vector.load %arg6[%c0_14, %c0_15] : memref<128x128xbf16, #tpu.memory_space<vmem>>, vector<128x128xbf16>
    %cst_16 = arith.constant dense<0.000000e+00> : vector<8x128xf32>
    %25 = tpu.matmul %23, %24, %cst_16 {dimension_numbers = #tpu.dot_dimension_numbers<[1], [0], [0], [1], [0, 0, 1, 1], [], []>} : vector<8x128xbf16>, vector<128x128xbf16>, vector<8x128xf32> -> vector<8x128xf32>
    %c0_17 = arith.constant 0 : index
    %c0_18 = arith.constant 0 : index
    %26 = vector.load %arg7[%c0_17, %c0_18] : memref<1x128xf32, #tpu.memory_space<vmem>>, vector<1x128xf32>
    %27 = vector.broadcast %26 : vector<1x128xf32> to vector<8x128xf32>
    %28 = arith.addf %25, %27 : vector<8x128xf32>
    %29 = arith.truncf %28 : vector<8x128xf32> to vector<8x128xbf16>
    %cst_19 = arith.constant 0.000000e+00 : bf16
    %30 = vector.broadcast %cst_19 : bf16 to vector<8x128xbf16>
    %31 = arith.maximumf %29, %30 : vector<8x128xbf16>
    %c0_20 = arith.constant 0 : index
    %c0_21 = arith.constant 0 : index
    %32 = vector.load %arg8[%c0_20, %c0_21] : memref<1x128xf32, #tpu.memory_space<vmem>>, vector<1x128xf32>
    %33 = arith.extf %31 : vector<8x128xbf16> to vector<8x128xf32>
    %cst_22 = arith.constant dense<0.000000e+00> : vector<1x8xf32>
    %34 = tpu.matmul %32, %33, %cst_22 {dimension_numbers = #tpu.dot_dimension_numbers<[1], [1], [0], [0], [0, 0, 1, 0], [], []>} : vector<1x128xf32>, vector<8x128xf32>, vector<1x8xf32> -> vector<1x8xf32>
    %c0_23 = arith.constant 0 : index
    %c0_24 = arith.constant 0 : index
    %35 = memref.load %arg9[%c0_23, %c0_24] : memref<1x1xf32, #tpu.memory_space<smem>>
    %36 = vector.broadcast %35 : f32 to vector<1x8xf32>
    %37 = arith.addf %34, %36 : vector<1x8xf32>
    %c0_25 = arith.constant 0 : index
    %c0_26 = arith.constant 0 : index
    %38 = vector.load %arg10[%c0_25, %c0_26] : memref<1x8xf32, #tpu.memory_space<vmem>>, vector<1x8xf32>
    tpu.vector_store %arg10[%c0_25, %c0_26], %37 {strides = array<i32>} : memref<1x8xf32, #tpu.memory_space<vmem>>, vector<1x8xf32>,
    return
  }
  func.func @transform_0(%arg0: i32) -> (i32, i32) {
    %c0_i32 = arith.constant 0 : i32
    %c0_i32_0 = arith.constant 0 : i32
    return %arg0, %c0_i32 : i32, i32
  }
  func.func @transform_1(%arg0: i32) -> (i32, i32) {
    %c0_i32 = arith.constant 0 : i32
    %c0_i32_0 = arith.constant 0 : i32
    %c0_i32_1 = arith.constant 0 : i32
    return %c0_i32, %c0_i32_0 : i32, i32
  }
  func.func @transform_2(%arg0: i32) -> (i32, i32) {
    %c0_i32 = arith.constant 0 : i32
    %c0_i32_0 = arith.constant 0 : i32
    %c0_i32_1 = arith.constant 0 : i32
    return %c0_i32, %c0_i32_0 : i32, i32
  }
  func.func @transform_3(%arg0: i32) -> (i32, i32) {
    %c0_i32 = arith.constant 0 : i32
    %c0_i32_0 = arith.constant 0 : i32
    %c0_i32_1 = arith.constant 0 : i32
    return %c0_i32, %c0_i32_0 : i32, i32
  }
  func.func @transform_4(%arg0: i32) -> (i32, i32) {
    %c0_i32 = arith.constant 0 : i32
    %c0_i32_0 = arith.constant 0 : i32
    %c0_i32_1 = arith.constant 0 : i32
    return %c0_i32, %c0_i32_0 : i32, i32
  }
  func.func @transform_5(%arg0: i32) -> (i32, i32) {
    %c0_i32 = arith.constant 0 : i32
    %c0_i32_0 = arith.constant 0 : i32
    %c0_i32_1 = arith.constant 0 : i32
    return %c0_i32, %c0_i32_0 : i32, i32
  }
  func.func @transform_6(%arg0: i32) -> (i32, i32) {
    %c0_i32 = arith.constant 0 : i32
    %c0_i32_0 = arith.constant 0 : i32
    %c0_i32_1 = arith.constant 0 : i32
    return %c0_i32, %c0_i32_0 : i32, i32
  }
  func.func @transform_7(%arg0: i32) -> (i32, i32) {
    %c0_i32 = arith.constant 0 : i32
    %c0_i32_0 = arith.constant 0 : i32
    %c0_i32_1 = arith.constant 0 : i32
    return %c0_i32, %c0_i32_0 : i32, i32
  }
  func.func @transform_8(%arg0: i32) -> (i32, i32) {
    %c0_i32 = arith.constant 0 : i32
    %c0_i32_0 = arith.constant 0 : i32
    %c0_i32_1 = arith.constant 0 : i32
    return %c0_i32, %c0_i32_0 : i32, i32
  }
  func.func @transform_9(%arg0: i32) -> (i32, i32) {
    %c0_i32 = arith.constant 0 : i32
    %c0_i32_0 = arith.constant 0 : i32
    return %arg0, %c0_i32 : i32, i32
  }
}

</mosaic_0001>

<llo_original>
// kernel: forward.1
$region0: #{forward.1}
  #allocation0 [shape = 'u32[]', space=smem, size = 0x4, offset = 0x4, fixed_abs, tag = 'smem constant byte address 0x4 - core index']
  #allocation1 [shape = 'u32[144,128]{1,0:T(1,128)}', space=vmem, size = 0x12000, scoped, tag = 'internal scratch']
  #allocation2 [shape = 'f32[1,1]{1,0:T(1,128)S(6)}', space=smem, size = 0x200, scoped, tag = 'scoped memory for forward.1']
  %s0 = inlined_call_operand.vmem [shape: f32[8,128], index: 0, kind: input, shape index: {}]
  %s1 = inlined_call_operand.hbm [shape: bf16[128,128], index: 1, kind: input, shape index: {}]
  %s2 = inlined_call_operand.vmem [shape: f32[1,128], index: 2, kind: input, shape index: {}]
  %s3 = inlined_call_operand.hbm [shape: bf16[128,128], index: 3, kind: input, shape index: {}]
  %s4 = inlined_call_operand.vmem [shape: f32[1,128], index: 4, kind: input, shape index: {}]
  %s5 = inlined_call_operand.hbm [shape: bf16[128,128], index: 5, kind: input, shape index: {}]
  %s6 = inlined_call_operand.vmem [shape: f32[1,128], index: 6, kind: input, shape index: {}]
  %s7 = inlined_call_operand.vmem [shape: f32[1,128], index: 7, kind: input, shape index: {}]
  %s8 = inlined_call_operand.<no memory space> [shape: f32[1,1], index: 8, kind: input, shape index: {}]
  %s9 = inlined_call_operand.hbm [shape: f32[1,8], index: 9, kind: output, shape index: {}]
  %s10 = sld [smem:[#allocation0]]
  $region58: #{forward.1} parent=0
    _
  %s12 = ssub.s32 1, %s10
  %s13 = scalar_select 0, %s12, %s10
  %14 = sst [smem:[#allocation2]] %s8
  $region1: #{forward.1} parent=0
    #allocation3 [shape = 'u8[32768]{0}', space=vmem, size = 0x8000, scoped, tag = 'input window, operand 1, single buffered']
    #allocation4 [shape = 's32[1]{0}', space=sflag, size = 0x4, scoped, tag = 'scoped memory for forward.1']
    #allocation5 [shape = 's32[1]{0}', space=sflag, size = 0x4, scoped, tag = 'scoped memory for forward.1']
    #allocation6 [shape = 'u8[32768]{0}', space=vmem, size = 0x8000, scoped, tag = 'input window, operand 3, single buffered']
    #allocation7 [shape = 's32[1]{0}', space=sflag, size = 0x4, scoped, tag = 'scoped memory for forward.1']
    #allocation8 [shape = 'u8[32768]{0}', space=vmem, size = 0x8000, scoped, tag = 'input window, operand 5, single buffered']
    #allocation9 [shape = 'u8[512]{0}', space=vmem, size = 0x400, scoped, tag = 'output window, operand 0, single buffered']
    %15 = vsyncpa [#allocation4], 0
    %16 = vsyncpa [#allocation7], 0
    %17 = vsyncpa [#allocation5], 0
    // Predicated region
    $region2: #{forward.1} parent=1 // pred_check
      _
    $region3: #{forward.1} parent=1 // pred_check_branch
      %19 = sbr.rel (0) target = $region5
    $region4: #{forward.1} parent=1 // pred_region
      _
    $region5: #{forward.1} parent=1 // pred_fallthru
      _
    // Predicated region
    $region6: #{forward.1} parent=1 // pred_check
      _
    $region7: #{forward.1} parent=1 // pred_check_branch
      %21 = sbr.rel (0) target = $region9
    $region8: #{forward.1} parent=1 // pred_region
      %s23 = ssub.s32 1024, 1024
      %24 = vsyncadd [#allocation4], %s23
      %s25 = sshll.u32 [#allocation3], 4
      %s26 = int_to_ptr.vmem [resolvable:$true] %s25
      %31 = dma.hbm_to_vmem [thread:$0]  %s1, 1024, %s26, [#allocation4], 64, 64, 4
    $region9: #{forward.1} parent=1 // pred_fallthru
      _
    // Predicated region
    $region10: #{forward.1} parent=1 // pred_check
      _
    $region11: #{forward.1} parent=1 // pred_check_branch
      %33 = sbr.rel (0) target = $region13
    $region12: #{forward.1} parent=1 // pred_region
      _
    $region13: #{forward.1} parent=1 // pred_fallthru
      _
    // Predicated region
    $region14: #{forward.1} parent=1 // pred_check
      _
    $region15: #{forward.1} parent=1 // pred_check_branch
      %35 = sbr.rel (0) target = $region17
    $region16: #{forward.1} parent=1 // pred_region
      %s37 = ssub.s32 1024, 1024
      %38 = vsyncadd [#allocation7], %s37
      %s39 = sshll.u32 [#allocation6], 4
      %s40 = int_to_ptr.vmem [resolvable:$true] %s39
      %45 = dma.hbm_to_vmem [thread:$0]  %s3, 1024, %s40, [#allocation7], 64, 64, 4
    $region17: #{forward.1} parent=1 // pred_fallthru
      _
    // Predicated region
    $region18: #{forward.1} parent=1 // pred_check
      _
    $region19: #{forward.1} parent=1 // pred_check_branch
      %47 = sbr.rel (0) target = $region21
    $region20: #{forward.1} parent=1 // pred_region
      _
    $region21: #{forward.1} parent=1 // pred_fallthru
      _
    // Predicated region
    $region22: #{forward.1} parent=1 // pred_check
      _
    $region23: #{forward.1} parent=1 // pred_check_branch
      %49 = sbr.rel (0) target = $region25
    $region24: #{forward.1} parent=1 // pred_region
      %s51 = ssub.s32 1024, 1024
      %52 = vsyncadd [#allocation7], %s51
      %s53 = sshll.u32 [#allocation8], 4
      %s54 = int_to_ptr.vmem [resolvable:$true] %s53
      %59 = dma.hbm_to_vmem [thread:$0]  %s5, 1024, %s54, [#allocation7], 64, 64, 4
    $region25: #{forward.1} parent=1 // pred_fallthru
      _
    // Predicated region
    $region26: #{forward.1} parent=1 // pred_check
      _
    $region27: #{forward.1} parent=1 // pred_check_branch
      %61 = sbr.rel (0) target = $region29
    $region28: #{forward.1} parent=1 // pred_region
      _
    $region29: #{forward.1} parent=1 // pred_fallthru
      _
    // Predicated region
    $region30: #{forward.1} parent=1 // pred_check
      _
    $region31: #{forward.1} parent=1 // pred_check_branch
      %63 = sbr.rel (0) target = $region33
    $region32: #{forward.1} parent=1 // pred_region
      _
    $region33: #{forward.1} parent=1 // pred_fallthru
      _
    // Predicated region
    $region34: #{forward.1} parent=1 // pred_check
      _
    $region35: #{forward.1} parent=1 // pred_check_branch
      %65 = sbr.rel (0) target = $region37
    $region36: #{forward.1} parent=1 // pred_region
      _
    $region37: #{forward.1} parent=1 // pred_fallthru
      _
    // Predicated region
    $region38: #{forward.1} parent=1 // pred_check
      _
    $region39: #{forward.1} parent=1 // pred_check_branch
      %67 = sbr.rel (0) target = $region41
    $region40: #{forward.1} parent=1 // pred_region
      %68 = dma.done [#allocation4], 1024
    $region41: #{forward.1} parent=1 // pred_fallthru
      _
    // Predicated region
    $region42: #{forward.1} parent=1 // pred_check
      _
    $region43: #{forward.1} parent=1 // pred_check_branch
      %70 = sbr.rel (0) target = $region45
    $region44: #{forward.1} parent=1 // pred_region
      %71 = dma.done [#allocation7], 1024
    $region45: #{forward.1} parent=1 // pred_fallthru
      _
    // Predicated region
    $region46: #{forward.1} parent=1 // pred_check
      _
    $region47: #{forward.1} parent=1 // pred_check_branch
      %73 = sbr.rel (0) target = $region49
    $region48: #{forward.1} parent=1 // pred_region
      %74 = dma.done [#allocation7], 1024
    $region49: #{forward.1} parent=1 // pred_fallthru
      _
    %v77 = vld [vmem:[%s0] sm:$0xff]
    %v78 = vpack.c.bf16 %v77, %v77
    %v79 = vld [vmem:[#allocation3] sm:$0xf]
    %v80 = vld [vmem:[#allocation3 + $0x4] sm:$0xf]
    %v81 = vld [vmem:[#allocation3 + $0x8] sm:$0xf]
    %v82 = vld [vmem:[#allocation3 + $0xc] sm:$0xf]
    %v83 = vld [vmem:[#allocation3 + $0x10] sm:$0xf]
    %v84 = vld [vmem:[#allocation3 + $0x14] sm:$0xf]
    %v85 = vld [vmem:[#allocation3 + $0x18] sm:$0xf]
    %v86 = vld [vmem:[#allocation3 + $0x1c] sm:$0xf]
    %v87 = vld [vmem:[#allocation3 + $0x20] sm:$0xf]
    %v88 = vld [vmem:[#allocation3 + $0x24] sm:$0xf]
    %v89 = vld [vmem:[#allocation3 + $0x28] sm:$0xf]
    %v90 = vld [vmem:[#allocation3 + $0x2c] sm:$0xf]
    %v91 = vld [vmem:[#allocation3 + $0x30] sm:$0xf]
    %v92 = vld [vmem:[#allocation3 + $0x34] sm:$0xf]
    %v93 = vld [vmem:[#allocation3 + $0x38] sm:$0xf]
    %v94 = vld [vmem:[#allocation3 + $0x3c] sm:$0xf]
    %v95 = vld [vmem:[%s2] sm:$0x1]
    %v97 = vlaneseq
    %v98 = vshrl.u32 %v97, 7
    %v99 = vsub.s32 0, %v98
    %v100 = vrot.slane %v95, %v99
    %v118 = vunpack.c.l.b16 %v79
    %v119 = vunpack.c.l.b16 %v80
    %v120 = vunpack.c.l.b16 %v81
    %v121 = vunpack.c.l.b16 %v82
    %v122 = vunpack.c.l.b16 %v83
    %v123 = vunpack.c.l.b16 %v84
    %v124 = vunpack.c.l.b16 %v85
    %v125 = vunpack.c.l.b16 %v86
    %v126 = vunpack.c.l.b16 %v87
    %v127 = vunpack.c.l.b16 %v88
    %v128 = vunpack.c.l.b16 %v89
    %v129 = vunpack.c.l.b16 %v90
    %v130 = vunpack.c.l.b16 %v91
    %v131 = vunpack.c.l.b16 %v92
    %v132 = vunpack.c.l.b16 %v93
    %v133 = vunpack.c.l.b16 %v94
    %v134 = vpack.c.b16 %v119, %v118
    %v135 = vpack.c.b16 %v121, %v120
    %v136 = vpack.c.b16 %v123, %v122
    %v137 = vpack.c.b16 %v125, %v124
    %v138 = vpack.c.b16 %v127, %v126
    %v139 = vpack.c.b16 %v129, %v128
    %v140 = vpack.c.b16 %v131, %v130
    %v141 = vpack.c.b16 %v133, %v132
    %150 = vmatprep.subr.bf16.mxu0 0
    %151 = vmatpush1.bf16.msra.mxu0 %v141
    %152 = vmatprep.subr.bf16.mxu0 0
    %153 = vmatpush1.bf16.msra.mxu0 %v140
    %154 = vmatprep.subr.bf16.mxu0 0
    %155 = vmatpush1.bf16.msra.mxu0 %v139
    %156 = vmatprep.subr.bf16.mxu0 0
    %157 = vmatpush1.bf16.msra.mxu0 %v138
    %158 = vmatprep.subr.bf16.mxu0 0
    %159 = vmatpush1.bf16.msra.mxu0 %v137
    %160 = vmatprep.subr.bf16.mxu0 0
    %161 = vmatpush1.bf16.msra.mxu0 %v136
    %162 = vmatprep.subr.bf16.mxu0 0
    %163 = vmatpush1.bf16.msra.mxu0 %v135
    %164 = vmatprep.subr.bf16.mxu0 0
    %165 = vmatpush1.bf16.msra.mxu0 %v134
    %166 = vmatprep.subr.bf16.mxu0 0
    %167 = vmatpush2.bf16.msra.mxu0 0
    %168 = vmatprep.subr.bf16.mxu0 0
    %169 = vmatpush2.bf16.msra.mxu0 0
    %170 = vmatprep.subr.bf16.mxu0 0
    %171 = vmatpush2.bf16.msra.mxu0 0
    %172 = vmatprep.subr.bf16.mxu0 0
    %173 = vmatpush2.bf16.msra.mxu0 0
    %174 = vmatprep.subr.bf16.mxu0 0
    %175 = vmatpush2.bf16.msra.mxu0 0
    %176 = vmatprep.subr.bf16.mxu0 0
    %177 = vmatpush2.bf16.msra.mxu0 0
    %178 = vmatprep.subr.bf16.mxu0 0
    %179 = vmatpush2.bf16.msra.mxu0 0
    %180 = vmatprep.subr.bf16.mxu0 0
    %181 = vmatpush2.bf16.msra.mxu0 0
    %182 = vmatprep.mubr.bf16.mxu0 0
    %183 = vmatmul.mubr.bf16.gmra.mxu0 %v78
    %v184 = vpop.f32.mrf.mxu0
    %v185 = vadd.f32 %v100, %v184
    %v186 = vpop.f32.mrf.mxu0
    %v187 = vpop.f32.mrf.mxu0
    %v188 = vpop.f32.mrf.mxu0
    %189 = vdwg.mxu0
    %v190 = vpack.c.bf16 %v185, %v185
    %vm191 = vcmp.gt.bf16.partialorder %v190, 0
    %v192 = vmul.bf16 %v190, 1009007652
    %v193 = vsel %vm191, %v190, %v192
    %v194 = vld [vmem:[#allocation6] sm:$0xf]
    %v195 = vld [vmem:[#allocation6 + $0x4] sm:$0xf]
    %v196 = vld [vmem:[#allocation6 + $0x8] sm:$0xf]
    %v197 = vld [vmem:[#allocation6 + $0xc] sm:$0xf]
    %v198 = vld [vmem:[#allocation6 + $0x10] sm:$0xf]
    %v199 = vld [vmem:[#allocation6 + $0x14] sm:$0xf]
    %v200 = vld [vmem:[#allocation6 + $0x18] sm:$0xf]
    %v201 = vld [vmem:[#allocation6 + $0x1c] sm:$0xf]
    %v202 = vld [vmem:[#allocation6 + $0x20] sm:$0xf]
    %v203 = vld [vmem:[#allocation6 + $0x24] sm:$0xf]
    %v204 = vld [vmem:[#allocation6 + $0x28] sm:$0xf]
    %v205 = vld [vmem:[#allocation6 + $0x2c] sm:$0xf]
    %v206 = vld [vmem:[#allocation6 + $0x30] sm:$0xf]
    %v207 = vld [vmem:[#allocation6 + $0x34] sm:$0xf]
    %v208 = vld [vmem:[#allocation6 + $0x38] sm:$0xf]
    %v209 = vld [vmem:[#allocation6 + $0x3c] sm:$0xf]
    %v210 = vld [vmem:[%s4] sm:$0x1]
    %v212 = vlaneseq
    %v213 = vshrl.u32 %v212, 7
    %v214 = vsub.s32 0, %v213
    %v215 = vrot.slane %v210, %v214
    %v233 = vunpack.c.l.b16 %v194
    %v234 = vunpack.c.l.b16 %v195
    %v235 = vunpack.c.l.b16 %v196
    %v236 = vunpack.c.l.b16 %v197
    %v237 = vunpack.c.l.b16 %v198
    %v238 = vunpack.c.l.b16 %v199
    %v239 = vunpack.c.l.b16 %v200
    %v240 = vunpack.c.l.b16 %v201
    %v241 = vunpack.c.l.b16 %v202
    %v242 = vunpack.c.l.b16 %v203
    %v243 = vunpack.c.l.b16 %v204
    %v244 = vunpack.c.l.b16 %v205
    %v245 = vunpack.c.l.b16 %v206
    %v246 = vunpack.c.l.b16 %v207
    %v247 = vunpack.c.l.b16 %v208
    %v248 = vunpack.c.l.b16 %v209
    %v249 = vpack.c.b16 %v234, %v233
    %v250 = vpack.c.b16 %v236, %v235
    %v251 = vpack.c.b16 %v238, %v237
    %v252 = vpack.c.b16 %v240, %v239
    %v253 = vpack.c.b16 %v242, %v241
    %v254 = vpack.c.b16 %v244, %v243
    %v255 = vpack.c.b16 %v246, %v245
    %v256 = vpack.c.b16 %v248, %v247
    %265 = vmatprep.subr.bf16.mxu0 0
    %266 = vmatpush1.bf16.msra.mxu0 %v256
    %267 = vmatprep.subr.bf16.mxu0 0
    %268 = vmatpush1.bf16.msra.mxu0 %v255
    %269 = vmatprep.subr.bf16.mxu0 0
    %270 = vmatpush1.bf16.msra.mxu0 %v254
    %271 = vmatprep.subr.bf16.mxu0 0
    %272 = vmatpush1.bf16.msra.mxu0 %v253
    %273 = vmatprep.subr.bf16.mxu0 0
    %274 = vmatpush1.bf16.msra.mxu0 %v252
    %275 = vmatprep.subr.bf16.mxu0 0
    %276 = vmatpush1.bf16.msra.mxu0 %v251
    %277 = vmatprep.subr.bf16.mxu0 0
    %278 = vmatpush1.bf16.msra.mxu0 %v250
    %279 = vmatprep.subr.bf16.mxu0 0
    %280 = vmatpush1.bf16.msra.mxu0 %v249
    %281 = vmatprep.subr.bf16.mxu0 0
    %282 = vmatpush2.bf16.msra.mxu0 0
    %283 = vmatprep.subr.bf16.mxu0 0
    %284 = vmatpush2.bf16.msra.mxu0 0
    %285 = vmatprep.subr.bf16.mxu0 0
    %286 = vmatpush2.bf16.msra.mxu0 0
    %287 = vmatprep.subr.bf16.mxu0 0
    %288 = vmatpush2.bf16.msra.mxu0 0
    %289 = vmatprep.subr.bf16.mxu0 0
    %290 = vmatpush2.bf16.msra.mxu0 0
    %291 = vmatprep.subr.bf16.mxu0 0
    %292 = vmatpush2.bf16.msra.mxu0 0
    %293 = vmatprep.subr.bf16.mxu0 0
    %294 = vmatpush2.bf16.msra.mxu0 0
    %295 = vmatprep.subr.bf16.mxu0 0
    %296 = vmatpush2.bf16.msra.mxu0 0
    %297 = vmatprep.mubr.bf16.mxu0 0
    %298 = vmatmul.mubr.bf16.gmra.mxu0 %v193
    %v299 = vpop.f32.mrf.mxu0
    %v300 = vadd.f32 %v215, %v299
    %v301 = vpop.f32.mrf.mxu0
    %v302 = vpop.f32.mrf.mxu0
    %v303 = vpop.f32.mrf.mxu0
    %304 = vdwg.mxu0
    %v305 = vpack.c.bf16 %v300, %v300
    %vm306 = vcmp.gt.bf16.partialorder %v305, 0
    %v307 = vmul.bf16 %v305, 1009007652
    %v308 = vsel %vm306, %v305, %v307
    %v309 = vld [vmem:[#allocation8] sm:$0xf]
    %v310 = vld [vmem:[#allocation8 + $0x4] sm:$0xf]
    %v311 = vld [vmem:[#allocation8 + $0x8] sm:$0xf]
    %v312 = vld [vmem:[#allocation8 + $0xc] sm:$0xf]
    %v313 = vld [vmem:[#allocation8 + $0x10] sm:$0xf]
    %v314 = vld [vmem:[#allocation8 + $0x14] sm:$0xf]
    %v315 = vld [vmem:[#allocation8 + $0x18] sm:$0xf]
    %v316 = vld [vmem:[#allocation8 + $0x1c] sm:$0xf]
    %v317 = vld [vmem:[#allocation8 + $0x20] sm:$0xf]
    %v318 = vld [vmem:[#allocation8 + $0x24] sm:$0xf]
    %v319 = vld [vmem:[#allocation8 + $0x28] sm:$0xf]
    %v320 = vld [vmem:[#allocation8 + $0x2c] sm:$0xf]
    %v321 = vld [vmem:[#allocation8 + $0x30] sm:$0xf]
    %v322 = vld [vmem:[#allocation8 + $0x34] sm:$0xf]
    %v323 = vld [vmem:[#allocation8 + $0x38] sm:$0xf]
    %v324 = vld [vmem:[#allocation8 + $0x3c] sm:$0xf]
    %v325 = vld [vmem:[%s6] sm:$0x1]
    %v327 = vlaneseq
    %v328 = vshrl.u32 %v327, 7
    %v329 = vsub.s32 0, %v328
    %v330 = vrot.slane %v325, %v329
    %v348 = vunpack.c.l.b16 %v309
    %v349 = vunpack.c.l.b16 %v310
    %v350 = vunpack.c.l.b16 %v311
    %v351 = vunpack.c.l.b16 %v312
    %v352 = vunpack.c.l.b16 %v313
    %v353 = vunpack.c.l.b16 %v314
    %v354 = vunpack.c.l.b16 %v315
    %v355 = vunpack.c.l.b16 %v316
    %v356 = vunpack.c.l.b16 %v317
    %v357 = vunpack.c.l.b16 %v318
    %v358 = vunpack.c.l.b16 %v319
    %v359 = vunpack.c.l.b16 %v320
    %v360 = vunpack.c.l.b16 %v321
    %v361 = vunpack.c.l.b16 %v322
    %v362 = vunpack.c.l.b16 %v323
    %v363 = vunpack.c.l.b16 %v324
    %v364 = vpack.c.b16 %v349, %v348
    %v365 = vpack.c.b16 %v351, %v350
    %v366 = vpack.c.b16 %v353, %v352
    %v367 = vpack.c.b16 %v355, %v354
    %v368 = vpack.c.b16 %v357, %v356
    %v369 = vpack.c.b16 %v359, %v358
    %v370 = vpack.c.b16 %v361, %v360
    %v371 = vpack.c.b16 %v363, %v362
    %380 = vmatprep.subr.bf16.mxu0 0
    %381 = vmatpush1.bf16.msra.mxu0 %v371
    %382 = vmatprep.subr.bf16.mxu0 0
    %383 = vmatpush1.bf16.msra.mxu0 %v370
    %384 = vmatprep.subr.bf16.mxu0 0
    %385 = vmatpush1.bf16.msra.mxu0 %v369
    %386 = vmatprep.subr.bf16.mxu0 0
    %387 = vmatpush1.bf16.msra.mxu0 %v368
    %388 = vmatprep.subr.bf16.mxu0 0
    %389 = vmatpush1.bf16.msra.mxu0 %v367
    %390 = vmatprep.subr.bf16.mxu0 0
    %391 = vmatpush1.bf16.msra.mxu0 %v366
    %392 = vmatprep.subr.bf16.mxu0 0
    %393 = vmatpush1.bf16.msra.mxu0 %v365
    %394 = vmatprep.subr.bf16.mxu0 0
    %395 = vmatpush1.bf16.msra.mxu0 %v364
    %396 = vmatprep.subr.bf16.mxu0 0
    %397 = vmatpush2.bf16.msra.mxu0 0
    %398 = vmatprep.subr.bf16.mxu0 0
    %399 = vmatpush2.bf16.msra.mxu0 0
    %400 = vmatprep.subr.bf16.mxu0 0
    %401 = vmatpush2.bf16.msra.mxu0 0
    %402 = vmatprep.subr.bf16.mxu0 0
    %403 = vmatpush2.bf16.msra.mxu0 0
    %404 = vmatprep.subr.bf16.mxu0 0
    %405 = vmatpush2.bf16.msra.mxu0 0
    %406 = vmatprep.subr.bf16.mxu0 0
    %407 = vmatpush2.bf16.msra.mxu0 0
    %408 = vmatprep.subr.bf16.mxu0 0
    %409 = vmatpush2.bf16.msra.mxu0 0
    %410 = vmatprep.subr.bf16.mxu0 0
    %411 = vmatpush2.bf16.msra.mxu0 0
    %412 = vmatprep.mubr.bf16.mxu0 0
    %413 = vmatmul.mubr.bf16.gmra.mxu0 %v308
    %v414 = vpop.f32.mrf.mxu0
    %v415 = vadd.f32 %v330, %v414
    %v416 = vpop.f32.mrf.mxu0
    %v417 = vpop.f32.mrf.mxu0
    %v418 = vpop.f32.mrf.mxu0
    %419 = vdwg.mxu0
    %v420 = vpack.c.bf16 %v415, %v415
    %v421 = vmax.bf16 %v420, 0
    %v422 = vld [vmem:[%s7] sm:$0x1]
    %v423 = vunpack.c.l.bf16 %v421
    %s424 = sld [smem:[#allocation2]]
    %v425 = vstv %s424
    %426 = vmatprep.subr.mxu0 0.0
    %427 = vmatpush1.xpose.msra.mxu0 0.0
    %428 = vmatprep.subr.mxu0 0.0
    %429 = vmatpush1.xpose.msra.mxu0 0.0
    %430 = vmatprep.subr.mxu0 0.0
    %431 = vmatpush1.xpose.msra.mxu0 0.0
    %432 = vmatprep.subr.mxu0 0.0
    %433 = vmatpush1.xpose.msra.mxu0 0.0
    %434 = vmatprep.subr.mxu0 0.0
    %435 = vmatpush1.xpose.msra.mxu0 0.0
    %436 = vmatprep.subr.mxu0 0.0
    %437 = vmatpush1.xpose.msra.mxu0 0.0
    %438 = vmatprep.subr.mxu0 0.0
    %439 = vmatpush1.xpose.msra.mxu0 0.0
    %440 = vmatprep.subr.mxu0 0.0
    %441 = vmatpush1.xpose.msra.mxu0 0.0
    %442 = vmatprep.subr.mxu0 0.0
    %443 = vmatpush1.xpose.msra.mxu0 0.0
    %444 = vmatprep.subr.mxu0 0.0
    %445 = vmatpush1.xpose.msra.mxu0 0.0
    %446 = vmatprep.subr.mxu0 0.0
    %447 = vmatpush1.xpose.msra.mxu0 0.0
    %448 = vmatprep.subr.mxu0 0.0
    %449 = vmatpush1.xpose.msra.mxu0 0.0
    %450 = vmatprep.subr.mxu0 0.0
    %451 = vmatpush1.xpose.msra.mxu0 0.0
    %452 = vmatprep.subr.mxu0 0.0
    %453 = vmatpush1.xpose.msra.mxu0 0.0
    %454 = vmatprep.subr.mxu0 0.0
    %455 = vmatpush1.xpose.msra.mxu0 0.0
    %456 = vmatprep.subr.mxu0 0.0
    %457 = vmatpush1.xpose.msra.mxu0 %v423
    %458 = vmatprep.subr.mxu0 0.0
    %459 = vmatpush2.xpose.msra.mxu0 0.0
    %460 = vmatprep.subr.mxu0 0.0
    %461 = vmatpush2.xpose.msra.mxu0 0.0
    %462 = vmatprep.subr.mxu0 0.0
    %463 = vmatpush2.xpose.msra.mxu0 0.0
    %464 = vmatprep.subr.mxu0 0.0
    %465 = vmatpush2.xpose.msra.mxu0 0.0
    %466 = vmatprep.subr.mxu0 0.0
    %467 = vmatpush2.xpose.msra.mxu0 0.0
    %468 = vmatprep.subr.mxu0 0.0
    %469 = vmatpush2.xpose.msra.mxu0 0.0
    %470 = vmatprep.subr.mxu0 0.0
    %471 = vmatpush2.xpose.msra.mxu0 0.0
    %472 = vmatprep.subr.mxu0 0.0
    %473 = vmatpush2.xpose.msra.mxu0 0.0
    %474 = vmatprep.subr.mxu0 0.0
    %475 = vmatpush2.xpose.msra.mxu0 0.0
    %476 = vmatprep.subr.mxu0 0.0
    %477 = vmatpush2.xpose.msra.mxu0 0.0
    %478 = vmatprep.subr.mxu0 0.0
    %479 = vmatpush2.xpose.msra.mxu0 0.0
    %480 = vmatprep.subr.mxu0 0.0
    %481 = vmatpush2.xpose.msra.mxu0 0.0
    %482 = vmatprep.subr.mxu0 0.0
    %483 = vmatpush2.xpose.msra.mxu0 0.0
    %484 = vmatprep.subr.mxu0 0.0
    %485 = vmatpush2.xpose.msra.mxu0 0.0
    %486 = vmatprep.subr.mxu0 0.0
    %487 = vmatpush2.xpose.msra.mxu0 0.0
    %488 = vmatprep.subr.mxu0 0.0
    %489 = vmatpush2.xpose.msra.mxu0 0.0
    %490 = vmatprep.mubr.f32.mxu0 0.0
    %491 = vmatmul.mubr.f32.gmra.mxu0 %v422
    %v492 = vpop.f32.mrf.mxu0
    %v493 = vadd.f32 %v425, %v492
    %v494 = vpop.f32.mrf.mxu0
    %495 = vdwg.mxu0
    %vm496 = vcmask 57344
    %497 = vst.msk [vmem:[#allocation9] sm:$0x1] %vm496, %v493
    // Predicated region
    $region50: #{forward.1} parent=1 // pred_check
      _
    $region51: #{forward.1} parent=1 // pred_check_branch
      %499 = sbr.rel (0) target = $region53
    $region52: #{forward.1} parent=1 // pred_region
      %s501 = ssub.s32 16, 16
      %502 = vsyncadd [#allocation5], %s501
      %s504 = sshll.u32 [#allocation9], 4
      %s505 = int_to_ptr.vmem [resolvable:$true] %s504
      %507 = dma.vmem_to_hbm [thread:$0]  %s505, 16, %s9, [#allocation5]
    $region53: #{forward.1} parent=1 // pred_fallthru
      _
    // Predicated region
    $region54: #{forward.1} parent=1 // pred_check
      _
    $region55: #{forward.1} parent=1 // pred_check_branch
      %509 = sbr.rel (0) target = $region57
    $region56: #{forward.1} parent=1 // pred_region
      %510 = dma.done [#allocation5], 16
    $region57: #{forward.1} parent=1 // pred_fallthru
      _
    %511 = vsyncpa [#allocation4], 1
    %512 = vsyncpa [#allocation7], 1
    %513 = vsyncpa [#allocation5], 1

// kernel: forward.1
$region0: #{forward.1}
  #allocation0 [shape = 'u32[]', space=smem, size = 0x4, offset = 0x4, fixed_abs, tag = 'smem constant byte address 0x4 - core index']
  #allocation1 [shape = 'u32[144,128]{1,0:T(1,128)}', space=vmem, size = 0x12000, scoped, tag = 'internal scratch']
  #allocation2 [shape = 'f32[1,1]{1,0:T(1,128)S(6)}', space=smem, size = 0x200, scoped, tag = 'scoped memory for forward.1']
  %s0 = inlined_call_operand.vmem [shape: f32[8,128], index: 0, kind: input, shape index: {}]
  %s1 = inlined_call_operand.hbm [shape: bf16[128,128], index: 1, kind: input, shape index: {}]
  %s2 = inlined_call_operand.vmem [shape: f32[1,128], index: 2, kind: input, shape index: {}]
  %s3 = inlined_call_operand.hbm [shape: bf16[128,128], index: 3, kind: input, shape index: {}]
  %s4 = inlined_call_operand.vmem [shape: f32[1,128], index: 4, kind: input, shape index: {}]
  %s5 = inlined_call_operand.hbm [shape: bf16[128,128], index: 5, kind: input, shape index: {}]
  %s6 = inlined_call_operand.vmem [shape: f32[1,128], index: 6, kind: input, shape index: {}]
  %s7 = inlined_call_operand.vmem [shape: f32[1,128], index: 7, kind: input, shape index: {}]
  %s8 = inlined_call_operand.<no memory space> [shape: f32[1,1], index: 8, kind: input, shape index: {}]
  %s9 = inlined_call_operand.hbm [shape: f32[1,8], index: 9, kind: output, shape index: {}]
  %s10 = sld [smem:[#allocation0]]
  $region58: #{forward.1} parent=0
    _
  %s12 = ssub.s32 1, %s10
  %s13 = scalar_select 0, %s12, %s10
  %14 = sst [smem:[#allocation2]] %s8
  $region1: #{forward.1} parent=0
    #allocation3 [shape = 'u8[32768]{0}', space=vmem, size = 0x8000, scoped, tag = 'input window, operand 1, single buffered']
    #allocation4 [shape = 's32[1]{0}', space=sflag, size = 0x4, scoped, tag = 'scoped memory for forward.1']
    #allocation5 [shape = 's32[1]{0}', space=sflag, size = 0x4, scoped, tag = 'scoped memory for forward.1']
    #allocation6 [shape = 'u8[32768]{0}', space=vmem, size = 0x8000, scoped, tag = 'input window, operand 3, single buffered']
    #allocation7 [shape = 's32[1]{0}', space=sflag, size = 0x4, scoped, tag = 'scoped memory for forward.1']
    #allocation8 [shape = 'u8[32768]{0}', space=vmem, size = 0x8000, scoped, tag = 'input window, operand 5, single buffered']
    #allocation9 [shape = 'u8[512]{0}', space=vmem, size = 0x400, scoped, tag = 'output window, operand 0, single buffered']
    %15 = vsyncpa [#allocation4], 0
    %16 = vsyncpa [#allocation7], 0
    %17 = vsyncpa [#allocation5], 0
    // Predicated region
    $region2: #{forward.1} parent=1 // pred_check
      _
    $region3: #{forward.1} parent=1 // pred_check_branch
      %19 = sbr.rel (0) target = $region5
    $region4: #{forward.1} parent=1 // pred_region
      _
    $region5: #{forward.1} parent=1 // pred_fallthru
      _
    // Predicated region
    $region6: #{forward.1} parent=1 // pred_check
      _
    $region7: #{forward.1} parent=1 // pred_check_branch
      %21 = sbr.rel (0) target = $region9
    $region8: #{forward.1} parent=1 // pred_region
      %s23 = ssub.s32 1024, 1024
      %24 = vsyncadd [#allocation4], %s23
      %s25 = sshll.u32 [#allocation3], 4
      %s26 = int_to_ptr.vmem [resolvable:$true] %s25
      %31 = dma.hbm_to_vmem [thread:$0]  %s1, 1024, %s26, [#allocation4], 64, 64, 4
    $region9: #{forward.1} parent=1 // pred_fallthru
      _
    // Predicated region
    $region10: #{forward.1} parent=1 // pred_check
      _
    $region11: #{forward.1} parent=1 // pred_check_branch
      %33 = sbr.rel (0) target = $region13
    $region12: #{forward.1} parent=1 // pred_region
      _
    $region13: #{forward.1} parent=1 // pred_fallthru
      _
    // Predicated region
    $region14: #{forward.1} parent=1 // pred_check
      _
    $region15: #{forward.1} parent=1 // pred_check_branch
      %35 = sbr.rel (0) target = $region17
    $region16: #{forward.1} parent=1 // pred_region
      %s37 = ssub.s32 1024, 1024
      %38 = vsyncadd [#allocation7], %s37
      %s39 = sshll.u32 [#allocation6], 4
      %s40 = int_to_ptr.vmem [resolvable:$true] %s39
      %45 = dma.hbm_to_vmem [thread:$0]  %s3, 1024, %s40, [#allocation7], 64, 64, 4
    $region17: #{forward.1} parent=1 // pred_fallthru
      _
    // Predicated region
    $region18: #{forward.1} parent=1 // pred_check
      _
    $region19: #{forward.1} parent=1 // pred_check_branch
      %47 = sbr.rel (0) target = $region21
    $region20: #{forward.1} parent=1 // pred_region
      _
    $region21: #{forward.1} parent=1 // pred_fallthru
      _
    // Predicated region
    $region22: #{forward.1} parent=1 // pred_check
      _
    $region23: #{forward.1} parent=1 // pred_check_branch
      %49 = sbr.rel (0) target = $region25
    $region24: #{forward.1} parent=1 // pred_region
      %s51 = ssub.s32 1024, 1024
      %52 = vsyncadd [#allocation7], %s51
      %s53 = sshll.u32 [#allocation8], 4
      %s54 = int_to_ptr.vmem [resolvable:$true] %s53
      %59 = dma.hbm_to_vmem [thread:$0]  %s5, 1024, %s54, [#allocation7], 64, 64, 4
    $region25: #{forward.1} parent=1 // pred_fallthru
      _
    // Predicated region
    $region26: #{forward.1} parent=1 // pred_check
      _
    $region27: #{forward.1} parent=1 // pred_check_branch
      %61 = sbr.rel (0) target = $region29
    $region28: #{forward.1} parent=1 // pred_region
      _
    $region29: #{forward.1} parent=1 // pred_fallthru
      _
    // Predicated region
    $region30: #{forward.1} parent=1 // pred_check
      _
    $region31: #{forward.1} parent=1 // pred_check_branch
      %63 = sbr.rel (0) target = $region33
    $region32: #{forward.1} parent=1 // pred_region
      _
    $region33: #{forward.1} parent=1 // pred_fallthru
      _
    // Predicated region
    $region34: #{forward.1} parent=1 // pred_check
      _
    $region35: #{forward.1} parent=1 // pred_check_branch
      %65 = sbr.rel (0) target = $region37
    $region36: #{forward.1} parent=1 // pred_region
      _
    $region37: #{forward.1} parent=1 // pred_fallthru
      _
    // Predicated region
    $region38: #{forward.1} parent=1 // pred_check
      _
    $region39: #{forward.1} parent=1 // pred_check_branch
      %67 = sbr.rel (0) target = $region41
    $region40: #{forward.1} parent=1 // pred_region
      %68 = dma.done [#allocation4], 1024
    $region41: #{forward.1} parent=1 // pred_fallthru
      _
    // Predicated region
    $region42: #{forward.1} parent=1 // pred_check
      _
    $region43: #{forward.1} parent=1 // pred_check_branch
      %70 = sbr.rel (0) target = $region45
    $region44: #{forward.1} parent=1 // pred_region
      %71 = dma.done [#allocation7], 1024
    $region45: #{forward.1} parent=1 // pred_fallthru
      _
    // Predicated region
    $region46: #{forward.1} parent=1 // pred_check
      _
    $region47: #{forward.1} parent=1 // pred_check_branch
      %73 = sbr.rel (0) target = $region49
    $region48: #{forward.1} parent=1 // pred_region
      %74 = dma.done [#allocation7], 1024
    $region49: #{forward.1} parent=1 // pred_fallthru
      _
    %v77 = vld [vmem:[%s0] sm:$0xff]
    %v78 = vpack.c.bf16 %v77, %v77
    %v79 = vld [vmem:[#allocation3] sm:$0xf]
    %v80 = vld [vmem:[#allocation3 + $0x4] sm:$0xf]
    %v81 = vld [vmem:[#allocation3 + $0x8] sm:$0xf]
    %v82 = vld [vmem:[#allocation3 + $0xc] sm:$0xf]
    %v83 = vld [vmem:[#allocation3 + $0x10] sm:$0xf]
    %v84 = vld [vmem:[#allocation3 + $0x14] sm:$0xf]
    %v85 = vld [vmem:[#allocation3 + $0x18] sm:$0xf]
    %v86 = vld [vmem:[#allocation3 + $0x1c] sm:$0xf]
    %v87 = vld [vmem:[#allocation3 + $0x20] sm:$0xf]
    %v88 = vld [vmem:[#allocation3 + $0x24] sm:$0xf]
    %v89 = vld [vmem:[#allocation3 + $0x28] sm:$0xf]
    %v90 = vld [vmem:[#allocation3 + $0x2c] sm:$0xf]
    %v91 = vld [vmem:[#allocation3 + $0x30] sm:$0xf]
    %v92 = vld [vmem:[#allocation3 + $0x34] sm:$0xf]
    %v93 = vld [vmem:[#allocation3 + $0x38] sm:$0xf]
    %v94 = vld [vmem:[#allocation3 + $0x3c] sm:$0xf]
    %v95 = vld [vmem:[%s2] sm:$0x1]
    %v97 = vlaneseq
    %v98 = vshrl.u32 %v97, 7
    %v99 = vsub.s32 0, %v98
    %v100 = vrot.slane %v95, %v99
    %v118 = vunpack.c.l.b16 %v79
    %v119 = vunpack.c.l.b16 %v80
    %v120 = vunpack.c.l.b16 %v81
    %v121 = vunpack.c.l.b16 %v82
    %v122 = vunpack.c.l.b16 %v83
    %v123 = vunpack.c.l.b16 %v84
    %v124 = vunpack.c.l.b16 %v85
    %v125 = vunpack.c.l.b16 %v86
    %v126 = vunpack.c.l.b16 %v87
    %v127 = vunpack.c.l.b16 %v88
    %v128 = vunpack.c.l.b16 %v89
    %v129 = vunpack.c.l.b16 %v90
    %v130 = vunpack.c.l.b16 %v91
    %v131 = vunpack.c.l.b16 %v92
    %v132 = vunpack.c.l.b16 %v93
    %v133 = vunpack.c.l.b16 %v94
    %v134 = vpack.c.b16 %v119, %v118
    %v135 = vpack.c.b16 %v121, %v120
    %v136 = vpack.c.b16 %v123, %v122
    %v137 = vpack.c.b16 %v125, %v124
    %v138 = vpack.c.b16 %v127, %v126
    %v139 = vpack.c.b16 %v129, %v128
    %v140 = vpack.c.b16 %v131, %v130
    %v141 = vpack.c.b16 %v133, %v132
    %150 = vmatprep.subr.bf16.mxu0 0
    %151 = vmatpush1.bf16.msra.mxu0 %v141
    %152 = vmatprep.subr.bf16.mxu0 0
    %153 = vmatpush1.bf16.msra.mxu0 %v140
    %154 = vmatprep.subr.bf16.mxu0 0
    %155 = vmatpush1.bf16.msra.mxu0 %v139
    %156 = vmatprep.subr.bf16.mxu0 0
    %157 = vmatpush1.bf16.msra.mxu0 %v138
    %158 = vmatprep.subr.bf16.mxu0 0
    %159 = vmatpush1.bf16.msra.mxu0 %v137
    %160 = vmatprep.subr.bf16.mxu0 0
    %161 = vmatpush1.bf16.msra.mxu0 %v136
    %162 = vmatprep.subr.bf16.mxu0 0
    %163 = vmatpush1.bf16.msra.mxu0 %v135
    %164 = vmatprep.subr.bf16.mxu0 0
    %165 = vmatpush1.bf16.msra.mxu0 %v134
    %166 = vmatprep.subr.bf16.mxu0 0
    %167 = vmatpush2.bf16.msra.mxu0 0
    %168 = vmatprep.subr.bf16.mxu0 0
    %169 = vmatpush2.bf16.msra.mxu0 0
    %170 = vmatprep.subr.bf16.mxu0 0
    %171 = vmatpush2.bf16.msra.mxu0 0
    %172 = vmatprep.subr.bf16.mxu0 0
    %173 = vmatpush2.bf16.msra.mxu0 0
    %174 = vmatprep.subr.bf16.mxu0 0
    %175 = vmatpush2.bf16.msra.mxu0 0
    %176 = vmatprep.subr.bf16.mxu0 0
    %177 = vmatpush2.bf16.msra.mxu0 0
    %178 = vmatprep.subr.bf16.mxu0 0
    %179 = vmatpush2.bf16.msra.mxu0 0
    %180 = vmatprep.subr.bf16.mxu0 0
    %181 = vmatpush2.bf16.msra.mxu0 0
    %182 = vmatprep.mubr.bf16.mxu0 0
    %183 = vmatmul.mubr.bf16.gmra.mxu0 %v78
    %v184 = vpop.f32.mrf.mxu0
    %v185 = vadd.f32 %v100, %v184
    %v186 = vpop.f32.mrf.mxu0
    %v187 = vpop.f32.mrf.mxu0
    %v188 = vpop.f32.mrf.mxu0
    %189 = vdwg.mxu0
    %v190 = vpack.c.bf16 %v185, %v185
    %vm191 = vcmp.gt.bf16.partialorder %v190, 0
    %v192 = vmul.bf16 %v190, 1009007652
    %v193 = vsel %vm191, %v190, %v192
    %v194 = vld [vmem:[#allocation6] sm:$0xf]
    %v195 = vld [vmem:[#allocation6 + $0x4] sm:$0xf]
    %v196 = vld [vmem:[#allocation6 + $0x8] sm:$0xf]
    %v197 = vld [vmem:[#allocation6 + $0xc] sm:$0xf]
    %v198 = vld [vmem:[#allocation6 + $0x10] sm:$0xf]
    %v199 = vld [vmem:[#allocation6 + $0x14] sm:$0xf]
    %v200 = vld [vmem:[#allocation6 + $0x18] sm:$0xf]
    %v201 = vld [vmem:[#allocation6 + $0x1c] sm:$0xf]
    %v202 = vld [vmem:[#allocation6 + $0x20] sm:$0xf]
    %v203 = vld [vmem:[#allocation6 + $0x24] sm:$0xf]
    %v204 = vld [vmem:[#allocation6 + $0x28] sm:$0xf]
    %v205 = vld [vmem:[#allocation6 + $0x2c] sm:$0xf]
    %v206 = vld [vmem:[#allocation6 + $0x30] sm:$0xf]
    %v207 = vld [vmem:[#allocation6 + $0x34] sm:$0xf]
    %v208 = vld [vmem:[#allocation6 + $0x38] sm:$0xf]
    %v209 = vld [vmem:[#allocation6 + $0x3c] sm:$0xf]
    %v210 = vld [vmem:[%s4] sm:$0x1]
    %v212 = vlaneseq
    %v213 = vshrl.u32 %v212, 7
    %v214 = vsub.s32 0, %v213
    %v215 = vrot.slane %v210, %v214
    %v233 = vunpack.c.l.b16 %v194
    %v234 = vunpack.c.l.b16 %v195
    %v235 = vunpack.c.l.b16 %v196
    %v236 = vunpack.c.l.b16 %v197
    %v237 = vunpack.c.l.b16 %v198
    %v238 = vunpack.c.l.b16 %v199
    %v239 = vunpack.c.l.b16 %v200
    %v240 = vunpack.c.l.b16 %v201
    %v241 = vunpack.c.l.b16 %v202
    %v242 = vunpack.c.l.b16 %v203
    %v243 = vunpack.c.l.b16 %v204
    %v244 = vunpack.c.l.b16 %v205
    %v245 = vunpack.c.l.b16 %v206
    %v246 = vunpack.c.l.b16 %v207
    %v247 = vunpack.c.l.b16 %v208
    %v248 = vunpack.c.l.b16 %v209
    %v249 = vpack.c.b16 %v234, %v233
    %v250 = vpack.c.b16 %v236, %v235
    %v251 = vpack.c.b16 %v238, %v237
    %v252 = vpack.c.b16 %v240, %v239
    %v253 = vpack.c.b16 %v242, %v241
    %v254 = vpack.c.b16 %v244, %v243
    %v255 = vpack.c.b16 %v246, %v245
    %v256 = vpack.c.b16 %v248, %v247
    %265 = vmatprep.subr.bf16.mxu0 0
    %266 = vmatpush1.bf16.msra.mxu0 %v256
    %267 = vmatprep.subr.bf16.mxu0 0
    %268 = vmatpush1.bf16.msra.mxu0 %v255
    %269 = vmatprep.subr.bf16.mxu0 0
    %270 = vmatpush1.bf16.msra.mxu0 %v254
    %271 = vmatprep.subr.bf16.mxu0 0
    %272 = vmatpush1.bf16.msra.mxu0 %v253
    %273 = vmatprep.subr.bf16.mxu0 0
    %274 = vmatpush1.bf16.msra.mxu0 %v252
    %275 = vmatprep.subr.bf16.mxu0 0
    %276 = vmatpush1.bf16.msra.mxu0 %v251
    %277 = vmatprep.subr.bf16.mxu0 0
    %278 = vmatpush1.bf16.msra.mxu0 %v250
    %279 = vmatprep.subr.bf16.mxu0 0
    %280 = vmatpush1.bf16.msra.mxu0 %v249
    %281 = vmatprep.subr.bf16.mxu0 0
    %282 = vmatpush2.bf16.msra.mxu0 0
    %283 = vmatprep.subr.bf16.mxu0 0
    %284 = vmatpush2.bf16.msra.mxu0 0
    %285 = vmatprep.subr.bf16.mxu0 0
    %286 = vmatpush2.bf16.msra.mxu0 0
    %287 = vmatprep.subr.bf16.mxu0 0
    %288 = vmatpush2.bf16.msra.mxu0 0
    %289 = vmatprep.subr.bf16.mxu0 0
    %290 = vmatpush2.bf16.msra.mxu0 0
    %291 = vmatprep.subr.bf16.mxu0 0
    %292 = vmatpush2.bf16.msra.mxu0 0
    %293 = vmatprep.subr.bf16.mxu0 0
    %294 = vmatpush2.bf16.msra.mxu0 0
    %295 = vmatprep.subr.bf16.mxu0 0
    %296 = vmatpush2.bf16.msra.mxu0 0
    %297 = vmatprep.mubr.bf16.mxu0 0
    %298 = vmatmul.mubr.bf16.gmra.mxu0 %v193
    %v299 = vpop.f32.mrf.mxu0
    %v300 = vadd.f32 %v215, %v299
    %v301 = vpop.f32.mrf.mxu0
    %v302 = vpop.f32.mrf.mxu0
    %v303 = vpop.f32.mrf.mxu0
    %304 = vdwg.mxu0
    %v305 = vpack.c.bf16 %v300, %v300
    %vm306 = vcmp.gt.bf16.partialorder %v305, 0
    %v307 = vmul.bf16 %v305, 1009007652
    %v308 = vsel %vm306, %v305, %v307
    %v309 = vld [vmem:[#allocation8] sm:$0xf]
    %v310 = vld [vmem:[#allocation8 + $0x4] sm:$0xf]
    %v311 = vld [vmem:[#allocation8 + $0x8] sm:$0xf]
    %v312 = vld [vmem:[#allocation8 + $0xc] sm:$0xf]
    %v313 = vld [vmem:[#allocation8 + $0x10] sm:$0xf]
    %v314 = vld [vmem:[#allocation8 + $0x14] sm:$0xf]
    %v315 = vld [vmem:[#allocation8 + $0x18] sm:$0xf]
    %v316 = vld [vmem:[#allocation8 + $0x1c] sm:$0xf]
    %v317 = vld [vmem:[#allocation8 + $0x20] sm:$0xf]
    %v318 = vld [vmem:[#allocation8 + $0x24] sm:$0xf]
    %v319 = vld [vmem:[#allocation8 + $0x28] sm:$0xf]
    %v320 = vld [vmem:[#allocation8 + $0x2c] sm:$0xf]
    %v321 = vld [vmem:[#allocation8 + $0x30] sm:$0xf]
    %v322 = vld [vmem:[#allocation8 + $0x34] sm:$0xf]
    %v323 = vld [vmem:[#allocation8 + $0x38] sm:$0xf]
    %v324 = vld [vmem:[#allocation8 + $0x3c] sm:$0xf]
    %v325 = vld [vmem:[%s6] sm:$0x1]
    %v327 = vlaneseq
    %v328 = vshrl.u32 %v327, 7
    %v329 = vsub.s32 0, %v328
    %v330 = vrot.slane %v325, %v329
    %v348 = vunpack.c.l.b16 %v309
    %v349 = vunpack.c.l.b16 %v310
    %v350 = vunpack.c.l.b16 %v311
    %v351 = vunpack.c.l.b16 %v312
    %v352 = vunpack.c.l.b16 %v313
    %v353 = vunpack.c.l.b16 %v314
    %v354 = vunpack.c.l.b16 %v315
    %v355 = vunpack.c.l.b16 %v316
    %v356 = vunpack.c.l.b16 %v317
    %v357 = vunpack.c.l.b16 %v318
    %v358 = vunpack.c.l.b16 %v319
    %v359 = vunpack.c.l.b16 %v320
    %v360 = vunpack.c.l.b16 %v321
    %v361 = vunpack.c.l.b16 %v322
    %v362 = vunpack.c.l.b16 %v323
    %v363 = vunpack.c.l.b16 %v324
    %v364 = vpack.c.b16 %v349, %v348
    %v365 = vpack.c.b16 %v351, %v350
    %v366 = vpack.c.b16 %v353, %v352
    %v367 = vpack.c.b16 %v355, %v354
    %v368 = vpack.c.b16 %v357, %v356
    %v369 = vpack.c.b16 %v359, %v358
    %v370 = vpack.c.b16 %v361, %v360
    %v371 = vpack.c.b16 %v363, %v362
    %380 = vmatprep.subr.bf16.mxu0 0
    %381 = vmatpush1.bf16.msra.mxu0 %v371
    %382 = vmatprep.subr.bf16.mxu0 0
    %383 = vmatpush1.bf16.msra.mxu0 %v370
    %384 = vmatprep.subr.bf16.mxu0 0
    %385 = vmatpush1.bf16.msra.mxu0 %v369
    %386 = vmatprep.subr.bf16.mxu0 0
    %387 = vmatpush1.bf16.msra.mxu0 %v368
    %388 = vmatprep.subr.bf16.mxu0 0
    %389 = vmatpush1.bf16.msra.mxu0 %v367
    %390 = vmatprep.subr.bf16.mxu0 0
    %391 = vmatpush1.bf16.msra.mxu0 %v366
    %392 = vmatprep.subr.bf16.mxu0 0
    %393 = vmatpush1.bf16.msra.mxu0 %v365
    %394 = vmatprep.subr.bf16.mxu0 0
    %395 = vmatpush1.bf16.msra.mxu0 %v364
    %396 = vmatprep.subr.bf16.mxu0 0
    %397 = vmatpush2.bf16.msra.mxu0 0
    %398 = vmatprep.subr.bf16.mxu0 0
    %399 = vmatpush2.bf16.msra.mxu0 0
    %400 = vmatprep.subr.bf16.mxu0 0
    %401 = vmatpush2.bf16.msra.mxu0 0
    %402 = vmatprep.subr.bf16.mxu0 0
    %403 = vmatpush2.bf16.msra.mxu0 0
    %404 = vmatprep.subr.bf16.mxu0 0
    %405 = vmatpush2.bf16.msra.mxu0 0
    %406 = vmatprep.subr.bf16.mxu0 0
    %407 = vmatpush2.bf16.msra.mxu0 0
    %408 = vmatprep.subr.bf16.mxu0 0
    %409 = vmatpush2.bf16.msra.mxu0 0
    %410 = vmatprep.subr.bf16.mxu0 0
    %411 = vmatpush2.bf16.msra.mxu0 0
    %412 = vmatprep.mubr.bf16.mxu0 0
    %413 = vmatmul.mubr.bf16.gmra.mxu0 %v308
    %v414 = vpop.f32.mrf.mxu0
    %v415 = vadd.f32 %v330, %v414
    %v416 = vpop.f32.mrf.mxu0
    %v417 = vpop.f32.mrf.mxu0
    %v418 = vpop.f32.mrf.mxu0
    %419 = vdwg.mxu0
    %v420 = vpack.c.bf16 %v415, %v415
    %v421 = vmax.bf16 %v420, 0
    %v422 = vld [vmem:[%s7] sm:$0x1]
    %v423 = vunpack.c.l.bf16 %v421
    %s424 = sld [smem:[#allocation2]]
    %v425 = vstv %s424
    %426 = vmatprep.subr.mxu0 0.0
    %427 = vmatpush1.xpose.msra.mxu0 0.0
    %428 = vmatprep.subr.mxu0 0.0
    %429 = vmatpush1.xpose.msra.mxu0 0.0
    %430 = vmatprep.subr.mxu0 0.0
    %431 = vmatpush1.xpose.msra.mxu0 0.0
    %432 = vmatprep.subr.mxu0 0.0
    %433 = vmatpush1.xpose.msra.mxu0 0.0
    %434 = vmatprep.subr.mxu0 0.0
    %435 = vmatpush1.xpose.msra.mxu0 0.0
    %436 = vmatprep.subr.mxu0 0.0
    %437 = vmatpush1.xpose.msra.mxu0 0.0
    %438 = vmatprep.subr.mxu0 0.0
    %439 = vmatpush1.xpose.msra.mxu0 0.0
    %440 = vmatprep.subr.mxu0 0.0
    %441 = vmatpush1.xpose.msra.mxu0 0.0
    %442 = vmatprep.subr.mxu0 0.0
    %443 = vmatpush1.xpose.msra.mxu0 0.0
    %444 = vmatprep.subr.mxu0 0.0
    %445 = vmatpush1.xpose.msra.mxu0 0.0
    %446 = vmatprep.subr.mxu0 0.0
    %447 = vmatpush1.xpose.msra.mxu0 0.0
    %448 = vmatprep.subr.mxu0 0.0
    %449 = vmatpush1.xpose.msra.mxu0 0.0
    %450 = vmatprep.subr.mxu0 0.0
    %451 = vmatpush1.xpose.msra.mxu0 0.0
    %452 = vmatprep.subr.mxu0 0.0
    %453 = vmatpush1.xpose.msra.mxu0 0.0
    %454 = vmatprep.subr.mxu0 0.0
    %455 = vmatpush1.xpose.msra.mxu0 0.0
    %456 = vmatprep.subr.mxu0 0.0
    %457 = vmatpush1.xpose.msra.mxu0 %v423
    %458 = vmatprep.subr.mxu0 0.0
    %459 = vmatpush2.xpose.msra.mxu0 0.0
    %460 = vmatprep.subr.mxu0 0.0
    %461 = vmatpush2.xpose.msra.mxu0 0.0
    %462 = vmatprep.subr.mxu0 0.0
    %463 = vmatpush2.xpose.msra.mxu0 0.0
    %464 = vmatprep.subr.mxu0 0.0
    %465 = vmatpush2.xpose.msra.mxu0 0.0
    %466 = vmatprep.subr.mxu0 0.0
    %467 = vmatpush2.xpose.msra.mxu0 0.0
    %468 = vmatprep.subr.mxu0 0.0
    %469 = vmatpush2.xpose.msra.mxu0 0.0
    %470 = vmatprep.subr.mxu0 0.0
    %471 = vmatpush2.xpose.msra.mxu0 0.0
    %472 = vmatprep.subr.mxu0 0.0
    %473 = vmatpush2.xpose.msra.mxu0 0.0
    %474 = vmatprep.subr.mxu0 0.0
    %475 = vmatpush2.xpose.msra.mxu0 0.0
    %476 = vmatprep.subr.mxu0 0.0
    %477 = vmatpush2.xpose.msra.mxu0 0.0
    %478 = vmatprep.subr.mxu0 0.0
    %479 = vmatpush2.xpose.msra.mxu0 0.0
    %480 = vmatprep.subr.mxu0 0.0
    %481 = vmatpush2.xpose.msra.mxu0 0.0
    %482 = vmatprep.subr.mxu0 0.0
    %483 = vmatpush2.xpose.msra.mxu0 0.0
    %484 = vmatprep.subr.mxu0 0.0
    %485 = vmatpush2.xpose.msra.mxu0 0.0
    %486 = vmatprep.subr.mxu0 0.0
    %487 = vmatpush2.xpose.msra.mxu0 0.0
    %488 = vmatprep.subr.mxu0 0.0
    %489 = vmatpush2.xpose.msra.mxu0 0.0
    %490 = vmatprep.mubr.f32.mxu0 0.0
    %491 = vmatmul.mubr.f32.gmra.mxu0 %v422
    %v492 = vpop.f32.mrf.mxu0
    %v493 = vadd.f32 %v425, %v492
    %v494 = vpop.f32.mrf.mxu0
    %495 = vdwg.mxu0
    %vm496 = vcmask 57344
    %497 = vst.msk [vmem:[#allocation9] sm:$0x1] %vm496, %v493
    // Predicated region
    $region50: #{forward.1} parent=1 // pred_check
      _
    $region51: #{forward.1} parent=1 // pred_check_branch
      %499 = sbr.rel (0) target = $region53
    $region52: #{forward.1} parent=1 // pred_region
      %s501 = ssub.s32 16, 16
      %502 = vsyncadd [#allocation5], %s501
      %s504 = sshll.u32 [#allocation9], 4
      %s505 = int_to_ptr.vmem [resolvable:$true] %s504
      %507 = dma.vmem_to_hbm [thread:$0]  %s505, 16, %s9, [#allocation5]
    $region53: #{forward.1} parent=1 // pred_fallthru
      _
    // Predicated region
    $region54: #{forward.1} parent=1 // pred_check
      _
    $region55: #{forward.1} parent=1 // pred_check_branch
      %509 = sbr.rel (0) target = $region57
    $region56: #{forward.1} parent=1 // pred_region
      %510 = dma.done [#allocation5], 16
    $region57: #{forward.1} parent=1 // pred_fallthru
      _
    %511 = vsyncpa [#allocation4], 1
    %512 = vsyncpa [#allocation7], 1
    %513 = vsyncpa [#allocation5], 1

</llo_original>
